<compile_context>
chip_gen: v7x
topology: tpu7x:2x2x1
jax: 0.10.0
libtpu: 0.0.40
codegen_flags: <defaults>
</compile_context>

<pallas_src>
import jax
import jax.numpy as jnp
from jax.experimental import pallas as pl
from jax.experimental.pallas import tpu as pltpu


# ----------------------------- Pallas kernel -------------------------------
def _residual_stack_kernel(x_ref, *refs):
    """refs = (w1_0, b1_0, w2_0, b2_0, ..., w1_{K-1}, ..., b2_{K-1}, o_ref)."""
    o_ref = refs[-1]
    layer_refs = refs[:-1]
    n_layers = len(layer_refs) // 4

    x = x_ref[...].astype(jnp.float32)                      # (tile, H)
    for l in range(n_layers):                               # K is 1-3: unroll
        w1, b1, w2, b2 = layer_refs[4 * l: 4 * l + 4]

        # lin1: bf16 MXU inputs, f32 accumulation; bias + SiLU in f32.
        h = jnp.dot(x.astype(jnp.bfloat16), w1[...],
                    preferred_element_type=jnp.float32)
        h = h + b1[...]                                     # (1, H) broadcast
        h = h * jax.nn.sigmoid(h)                           # SiLU (VPU + EUP)

        # lin2: same recipe.
        h = jnp.dot(h.astype(jnp.bfloat16), w2[...],
                    preferred_element_type=jnp.float32)
        h = h + b2[...]
        h = h * jax.nn.sigmoid(h)

        x = x + h                                           # residual, f32

    o_ref[...] = x.astype(o_ref.dtype)


# --------------------------- parameter preparation ---------------------------
def prepare_params(w1, b1, w2, b2):
    """One-time glue: PyTorch (out,in) weights -> (in,out) bf16, biases -> (1,H) f32."""
    H = w1.shape[0]
    w1_t = jnp.asarray(w1).T.astype(jnp.bfloat16)            # (in, out)
    w2_t = jnp.asarray(w2).T.astype(jnp.bfloat16)
    b1_2d = jnp.asarray(b1).reshape(1, H).astype(jnp.float32)
    b2_2d = jnp.asarray(b2).reshape(1, H).astype(jnp.float32)
    return w1_t, b1_2d, w2_t, b2_2d


def _round_up(a, b):
    return (a + b - 1) // b * b


# ------------------------------ JAX wrappers ---------------------------------
def residual_layer_stack(x, layers, *, tile_n=1024, donate_x=False):
    """Apply K fused ResidualLayers.  x: (N, H) f32; layers: list of prepare_params tuples."""
    N, H = x.shape
    n_layers = len(layers)

    # Row tile: single step for small N (no ">=2 steps" heuristic), big enough
    # to amortize per-step overhead on large N.  Must be a multiple of 8.
    tile = int(min(tile_n, _round_up(N, 8)))
    grid = (pl.cdiv(N, tile),)                               # partial tail OK

    flat_params = []
    for (w1, b1, w2, b2) in layers:
        flat_params += [w1, b1, w2, b2]

    in_specs = [pl.BlockSpec((tile, H), lambda i: (i, 0))]   # x tile
    for _ in range(n_layers):
        in_specs += [
            pl.BlockSpec((H, H), lambda i: (0, 0)),          # W1^T (resident)
            pl.BlockSpec((1, H), lambda i: (0, 0)),          # b1
            pl.BlockSpec((H, H), lambda i: (0, 0)),          # W2^T (resident)
            pl.BlockSpec((1, H), lambda i: (0, 0)),          # b2
        ]

    # Footprint: double-buffered x/out tiles (f32) + double-buffered bf16
    # weights / f32 biases.  2x headroom for in-kernel intermediates.
    vmem_bytes = 4 * tile * H * 4 + n_layers * (4 * H * H * 2 + 4 * H * 4)
    vmem_limit = int(min(max(2 * vmem_bytes, 8 << 20), 64 << 20))

    cost = pl.CostEstimate(
        flops=n_layers * 2 * 2 * N * H * H,
        transcendentals=n_layers * 2 * N * H,
        bytes_accessed=2 * N * H * 4 + n_layers * (2 * H * H * 2 + 2 * H * 4),
    )

    return pl.pallas_call(
        _residual_stack_kernel,
        out_shape=jax.ShapeDtypeStruct((N, H), x.dtype),
        grid_spec=pltpu.PrefetchScalarGridSpec(
            num_scalar_prefetch=0,
            grid=grid,
            in_specs=in_specs,
            out_specs=pl.BlockSpec((tile, H), lambda i: (i, 0)),
        ),
        compiler_params=pltpu.CompilerParams(
            dimension_semantics=("parallel",),
            vmem_limit_bytes=vmem_limit,
        ),
        cost_estimate=cost,
        input_output_aliases=({0: 0} if donate_x else {}),
    )(x, *flat_params)


def residual_layer(x, params, *, tile_n=1024, donate_x=False):
    """Single ResidualLayer forward, matching the PyTorch module."""
    return residual_layer_stack(x, [params], tile_n=tile_n, donate_x=donate_x)


# --------------------- deterministic parameter init -------------------------
def glorot_orthogonal(key, shape, scale=2.0):
    """JAX re-implementation of DimeNet's glorot_orthogonal init."""
    w = jax.nn.initializers.orthogonal()(key, shape, jnp.float32)
    fan = shape[-2] + shape[-1]
    var = jnp.var(w)
    s = scale / (fan * var)
    return w * jnp.sqrt(s)


def reference(x, w1, b1, w2, b2):
    """Pure-JAX f32 reference of the PyTorch forward."""
    h = jax.nn.silu(x @ w1.T + b1)
    h = jax.nn.silu(h @ w2.T + b2)
    return x + h


# --------------------------------- main --------------------------------------
if __name__ == "__main__":
    N, H = 16, 128                     # small batch of edge/node embeddings
    key = jax.random.PRNGKey(0)
    kx, kw1, kw2, kb1, kb2, kw3, kw4, kb3, kb4 = jax.random.split(key, 9)

    x = jax.random.normal(kx, (N, H), dtype=jnp.float32)
    bound = 1.0 / jnp.sqrt(H)

    # Layer A (PyTorch (out_features, in_features) layout).
    w1a = glorot_orthogonal(kw1, (H, H), scale=2.0)
    w2a = glorot_orthogonal(kw2, (H, H), scale=2.0)
    b1a = jax.random.uniform(kb1, (H,), jnp.float32, -bound, bound)
    b2a = jax.random.uniform(kb2, (H,), jnp.float32, -bound, bound)
    # Layer B (for the fused 2-layer stack test).
    w1b = glorot_orthogonal(kw3, (H, H), scale=2.0)
    w2b = glorot_orthogonal(kw4, (H, H), scale=2.0)
    b1b = jax.random.uniform(kb3, (H,), jnp.float32, -bound, bound)
    b2b = jax.random.uniform(kb4, (H,), jnp.float32, -bound, bound)

    params_a = prepare_params(w1a, b1a, w2a, b2a)    # one-time weight prep
    params_b = prepare_params(w1b, b1b, w2b, b2b)

    # 1) Single layer (the PyTorch module), small N -> single grid step.
    out = jax.block_until_ready(residual_layer(x, params_a))
    ref = reference(x, w1a, b1a, w2a, b2a)
    assert out.shape == (N, H) and out.dtype == x.dtype
    # bf16 MXU inputs with f32 accumulation -> looser tolerance than pure f32.
    assert jnp.allclose(out, ref, atol=5e-2, rtol=5e-2), "mismatch vs reference"

    # 2) Ragged N (not a multiple of 8): exercises the partial tail block,
    #    no pad/slice copies.
    xr = jax.random.normal(kx, (37, H), dtype=jnp.float32)
    outr = jax.block_until_ready(residual_layer(xr, params_a))
    refr = reference(xr, w1a, b1a, w2a, b2a)
    assert outr.shape == (37, H)
    assert jnp.allclose(outr, refr, atol=5e-2, rtol=5e-2), "ragged mismatch"

    # 3) Fused 2-layer stack (the DimeNet residual block pattern): one HBM pass.
    out2 = jax.block_until_ready(residual_layer_stack(x, [params_a, params_b]))
    ref2 = reference(reference(x, w1a, b1a, w2a, b2a), w1b, b1b, w2b, b2b)
    assert out2.shape == (N, H)
    assert jnp.allclose(out2, ref2, atol=5e-2, rtol=5e-2), "fused-stack mismatch"

    print("KERNEL_OK")
</pallas_src>

<mosaic_0001>
module attributes {stable_mosaic.version = 11 : i64} {
  func.func @_residual_stack_kernel(%arg0: i32, %arg1: memref<16x128xf32, #tpu.memory_space<vmem>>, %arg2: memref<128x128xbf16, #tpu.memory_space<vmem>>, %arg3: memref<1x128xf32, #tpu.memory_space<vmem>>, %arg4: memref<128x128xbf16, #tpu.memory_space<vmem>>, %arg5: memref<1x128xf32, #tpu.memory_space<vmem>>, %arg6: memref<16x128xf32, #tpu.memory_space<vmem>>) attributes {dimension_semantics = [#tpu.dimension_semantics<parallel>], iteration_bounds = array<i64: 1>, scalar_prefetch = 0 : i64, scratch_operands = 0 : i64, tpu.core_type = #tpu.core_type<tc>, window_params = [{transform_indices = @transform_0, window_bounds = array<i64: 16, 128>}, {pipeline_mode = #tpu.pipeline_mode<synchronous>, transform_indices = @transform_1, window_bounds = array<i64: 128, 128>}, {pipeline_mode = #tpu.pipeline_mode<synchronous>, transform_indices = @transform_2, window_bounds = array<i64: 1, 128>}, {pipeline_mode = #tpu.pipeline_mode<synchronous>, transform_indices = @transform_3, window_bounds = array<i64: 128, 128>}, {pipeline_mode = #tpu.pipeline_mode<synchronous>, transform_indices = @transform_4, window_bounds = array<i64: 1, 128>}, {transform_indices = @transform_5, window_bounds = array<i64: 16, 128>}]} {
    %c0 = arith.constant 0 : index
    %c0_0 = arith.constant 0 : index
    %0 = vector.load %arg1[%c0, %c0_0] : memref<16x128xf32, #tpu.memory_space<vmem>>, vector<16x128xf32>
    %1 = arith.truncf %0 : vector<16x128xf32> to vector<16x128xbf16>
    %c0_1 = arith.constant 0 : index
    %c0_2 = arith.constant 0 : index
    %2 = vector.load %arg2[%c0_1, %c0_2] : memref<128x128xbf16, #tpu.memory_space<vmem>>, vector<128x128xbf16>
    %cst = arith.constant dense<0.000000e+00> : vector<16x128xf32>
    %3 = tpu.matmul %1, %2, %cst {dimension_numbers = #tpu.dot_dimension_numbers<[1], [0], [0], [1], [0, 0, 1, 1], [], []>} : vector<16x128xbf16>, vector<128x128xbf16>, vector<16x128xf32> -> vector<16x128xf32>
    %c0_3 = arith.constant 0 : index
    %c0_4 = arith.constant 0 : index
    %4 = vector.load %arg3[%c0_3, %c0_4] : memref<1x128xf32, #tpu.memory_space<vmem>>, vector<1x128xf32>
    %5 = vector.broadcast %4 : vector<1x128xf32> to vector<16x128xf32>
    %6 = arith.addf %3, %5 : vector<16x128xf32>
    %7 = arith.negf %6 : vector<16x128xf32>
    %8 = math.exp %7 : vector<16x128xf32>
    %cst_5 = arith.constant 1.000000e+00 : f32
    %9 = vector.broadcast %cst_5 : f32 to vector<16x128xf32>
    %10 = arith.addf %9, %8 : vector<16x128xf32>
    %11 = arith.divf %9, %10 : vector<16x128xf32>
    %12 = arith.mulf %6, %11 : vector<16x128xf32>
    %13 = arith.truncf %12 : vector<16x128xf32> to vector<16x128xbf16>
    %c0_6 = arith.constant 0 : index
    %c0_7 = arith.constant 0 : index
    %14 = vector.load %arg4[%c0_6, %c0_7] : memref<128x128xbf16, #tpu.memory_space<vmem>>, vector<128x128xbf16>
    %cst_8 = arith.constant dense<0.000000e+00> : vector<16x128xf32>
    %15 = tpu.matmul %13, %14, %cst_8 {dimension_numbers = #tpu.dot_dimension_numbers<[1], [0], [0], [1], [0, 0, 1, 1], [], []>} : vector<16x128xbf16>, vector<128x128xbf16>, vector<16x128xf32> -> vector<16x128xf32>
    %c0_9 = arith.constant 0 : index
    %c0_10 = arith.constant 0 : index
    %16 = vector.load %arg5[%c0_9, %c0_10] : memref<1x128xf32, #tpu.memory_space<vmem>>, vector<1x128xf32>
    %17 = vector.broadcast %16 : vector<1x128xf32> to vector<16x128xf32>
    %18 = arith.addf %15, %17 : vector<16x128xf32>
    %19 = arith.negf %18 : vector<16x128xf32>
    %20 = math.exp %19 : vector<16x128xf32>
    %cst_11 = arith.constant 1.000000e+00 : f32
    %21 = vector.broadcast %cst_11 : f32 to vector<16x128xf32>
    %22 = arith.addf %21, %20 : vector<16x128xf32>
    %23 = arith.divf %21, %22 : vector<16x128xf32>
    %24 = arith.mulf %18, %23 : vector<16x128xf32>
    %25 = arith.addf %0, %24 : vector<16x128xf32>
    %c0_12 = arith.constant 0 : index
    %c0_13 = arith.constant 0 : index
    %26 = vector.load %arg6[%c0_12, %c0_13] : memref<16x128xf32, #tpu.memory_space<vmem>>, vector<16x128xf32>
    tpu.vector_store %arg6[%c0_12, %c0_13], %25 {strides = array<i32>} : memref<16x128xf32, #tpu.memory_space<vmem>>, vector<16x128xf32>,
    return
  }
  func.func @transform_0(%arg0: i32) -> (i32, i32) {
    %c0_i32 = arith.constant 0 : i32
    %c0_i32_0 = arith.constant 0 : i32
    return %arg0, %c0_i32 : i32, i32
  }
  func.func @transform_1(%arg0: i32) -> (i32, i32) {
    %c0_i32 = arith.constant 0 : i32
    %c0_i32_0 = arith.constant 0 : i32
    %c0_i32_1 = arith.constant 0 : i32
    return %c0_i32, %c0_i32_0 : i32, i32
  }
  func.func @transform_2(%arg0: i32) -> (i32, i32) {
    %c0_i32 = arith.constant 0 : i32
    %c0_i32_0 = arith.constant 0 : i32
    %c0_i32_1 = arith.constant 0 : i32
    return %c0_i32, %c0_i32_0 : i32, i32
  }
  func.func @transform_3(%arg0: i32) -> (i32, i32) {
    %c0_i32 = arith.constant 0 : i32
    %c0_i32_0 = arith.constant 0 : i32
    %c0_i32_1 = arith.constant 0 : i32
    return %c0_i32, %c0_i32_0 : i32, i32
  }
  func.func @transform_4(%arg0: i32) -> (i32, i32) {
    %c0_i32 = arith.constant 0 : i32
    %c0_i32_0 = arith.constant 0 : i32
    %c0_i32_1 = arith.constant 0 : i32
    return %c0_i32, %c0_i32_0 : i32, i32
  }
  func.func @transform_5(%arg0: i32) -> (i32, i32) {
    %c0_i32 = arith.constant 0 : i32
    %c0_i32_0 = arith.constant 0 : i32
    return %arg0, %c0_i32 : i32, i32
  }
}

</mosaic_0001>

<llo_original>
// kernel: tpu_custom_call.1
$region0: #{tpu_custom_call.1}
  #allocation0 [shape = 'u32[]', space=smem, size = 0x4, offset = 0x4, fixed_abs, tag = 'smem constant byte address 0x4 - core index']
  #allocation1 [shape = 'u32[144,128]{1,0:T(1,128)}', space=vmem, size = 0x12000, scoped, tag = 'internal scratch']
  %s0 = inlined_call_operand.hbm [shape: f32[16,128], index: 0, kind: input, shape index: {}]
  %s1 = inlined_call_operand.hbm [shape: bf16[128,128], index: 1, kind: input, shape index: {}]
  %s2 = inlined_call_operand.vmem [shape: f32[1,128], index: 2, kind: input, shape index: {}]
  %s3 = inlined_call_operand.hbm [shape: bf16[128,128], index: 3, kind: input, shape index: {}]
  %s4 = inlined_call_operand.vmem [shape: f32[1,128], index: 4, kind: input, shape index: {}]
  %s5 = inlined_call_operand.hbm [shape: f32[16,128], index: 5, kind: output, shape index: {}]
  %s6 = sld [smem:[#allocation0]]
  $region42: #{tpu_custom_call.1} parent=0
    _
  %s8 = ssub.s32 1, %s6
  %s9 = scalar_select 0, %s8, %s6
  $region1: #{tpu_custom_call.1} parent=0
    #allocation2 [shape = 'u8[8192]{0}', space=vmem, size = 0x2000, scoped, tag = 'input window, operand 0, single buffered']
    #allocation3 [shape = 's32[1]{0}', space=sflag, size = 0x4, scoped, tag = 'scoped memory for tpu_custom_call.1']
    #allocation4 [shape = 's32[1]{0}', space=sflag, size = 0x4, scoped, tag = 'scoped memory for tpu_custom_call.1']
    #allocation5 [shape = 'u8[32768]{0}', space=vmem, size = 0x8000, scoped, tag = 'input window, operand 1, single buffered']
    #allocation6 [shape = 's32[1]{0}', space=sflag, size = 0x4, scoped, tag = 'scoped memory for tpu_custom_call.1']
    #allocation7 [shape = 'u8[32768]{0}', space=vmem, size = 0x8000, scoped, tag = 'input window, operand 3, single buffered']
    #allocation8 [shape = 'u8[8192]{0}', space=vmem, size = 0x2000, scoped, tag = 'output window, operand 0, single buffered']
    %10 = vsyncpa [#allocation3], 0
    %11 = vsyncpa [#allocation6], 0
    %12 = vsyncpa [#allocation4], 0
    // Predicated region
    $region2: #{tpu_custom_call.1} parent=1 // pred_check
      _
    $region3: #{tpu_custom_call.1} parent=1 // pred_check_branch
      %14 = sbr.rel (0) target = $region5
    $region4: #{tpu_custom_call.1} parent=1 // pred_region
      %s16 = ssub.s32 256, 256
      %17 = vsyncadd [#allocation3], %s16
      %s18 = sshll.u32 [#allocation2], 4
      %s19 = int_to_ptr.vmem [resolvable:$true] %s18
      %24 = dma.hbm_to_vmem [thread:$0]  %s0, 256, %s19, [#allocation3], 128, 128, 8
    $region5: #{tpu_custom_call.1} parent=1 // pred_fallthru
      _
    // Predicated region
    $region6: #{tpu_custom_call.1} parent=1 // pred_check
      _
    $region7: #{tpu_custom_call.1} parent=1 // pred_check_branch
      %26 = sbr.rel (0) target = $region9
    $region8: #{tpu_custom_call.1} parent=1 // pred_region
      %s28 = ssub.s32 1024, 1024
      %29 = vsyncadd [#allocation6], %s28
      %s30 = sshll.u32 [#allocation5], 4
      %s31 = int_to_ptr.vmem [resolvable:$true] %s30
      %36 = dma.hbm_to_vmem [thread:$0]  %s1, 1024, %s31, [#allocation6], 64, 64, 4
    $region9: #{tpu_custom_call.1} parent=1 // pred_fallthru
      _
    // Predicated region
    $region10: #{tpu_custom_call.1} parent=1 // pred_check
      _
    $region11: #{tpu_custom_call.1} parent=1 // pred_check_branch
      %38 = sbr.rel (0) target = $region13
    $region12: #{tpu_custom_call.1} parent=1 // pred_region
      _
    $region13: #{tpu_custom_call.1} parent=1 // pred_fallthru
      _
    // Predicated region
    $region14: #{tpu_custom_call.1} parent=1 // pred_check
      _
    $region15: #{tpu_custom_call.1} parent=1 // pred_check_branch
      %40 = sbr.rel (0) target = $region17
    $region16: #{tpu_custom_call.1} parent=1 // pred_region
      %s42 = ssub.s32 1024, 1024
      %43 = vsyncadd [#allocation6], %s42
      %s44 = sshll.u32 [#allocation7], 4
      %s45 = int_to_ptr.vmem [resolvable:$true] %s44
      %50 = dma.hbm_to_vmem [thread:$0]  %s3, 1024, %s45, [#allocation6], 64, 64, 4
    $region17: #{tpu_custom_call.1} parent=1 // pred_fallthru
      _
    // Predicated region
    $region18: #{tpu_custom_call.1} parent=1 // pred_check
      _
    $region19: #{tpu_custom_call.1} parent=1 // pred_check_branch
      %52 = sbr.rel (0) target = $region21
    $region20: #{tpu_custom_call.1} parent=1 // pred_region
      _
    $region21: #{tpu_custom_call.1} parent=1 // pred_fallthru
      _
    // Predicated region
    $region22: #{tpu_custom_call.1} parent=1 // pred_check
      _
    $region23: #{tpu_custom_call.1} parent=1 // pred_check_branch
      %54 = sbr.rel (0) target = $region25
    $region24: #{tpu_custom_call.1} parent=1 // pred_region
      %55 = dma.done [#allocation3], 256
    $region25: #{tpu_custom_call.1} parent=1 // pred_fallthru
      _
    // Predicated region
    $region26: #{tpu_custom_call.1} parent=1 // pred_check
      _
    $region27: #{tpu_custom_call.1} parent=1 // pred_check_branch
      %57 = sbr.rel (0) target = $region29
    $region28: #{tpu_custom_call.1} parent=1 // pred_region
      %58 = dma.done [#allocation6], 1024
    $region29: #{tpu_custom_call.1} parent=1 // pred_fallthru
      _
    // Predicated region
    $region30: #{tpu_custom_call.1} parent=1 // pred_check
      _
    $region31: #{tpu_custom_call.1} parent=1 // pred_check_branch
      %60 = sbr.rel (0) target = $region33
    $region32: #{tpu_custom_call.1} parent=1 // pred_region
      %61 = dma.done [#allocation6], 1024
    $region33: #{tpu_custom_call.1} parent=1 // pred_fallthru
      _
    %v63 = vld [vmem:[#allocation2] sm:$0xff]
    %v64 = vld [vmem:[#allocation2 + $0x8] sm:$0xff]
    %v65 = vpack.c.bf16 %v64, %v63
    %v66 = vld [vmem:[#allocation5] sm:$0xf]
    %v67 = vld [vmem:[#allocation5 + $0x4] sm:$0xf]
    %v68 = vld [vmem:[#allocation5 + $0x8] sm:$0xf]
    %v69 = vld [vmem:[#allocation5 + $0xc] sm:$0xf]
    %v70 = vld [vmem:[#allocation5 + $0x10] sm:$0xf]
    %v71 = vld [vmem:[#allocation5 + $0x14] sm:$0xf]
    %v72 = vld [vmem:[#allocation5 + $0x18] sm:$0xf]
    %v73 = vld [vmem:[#allocation5 + $0x1c] sm:$0xf]
    %v74 = vld [vmem:[#allocation5 + $0x20] sm:$0xf]
    %v75 = vld [vmem:[#allocation5 + $0x24] sm:$0xf]
    %v76 = vld [vmem:[#allocation5 + $0x28] sm:$0xf]
    %v77 = vld [vmem:[#allocation5 + $0x2c] sm:$0xf]
    %v78 = vld [vmem:[#allocation5 + $0x30] sm:$0xf]
    %v79 = vld [vmem:[#allocation5 + $0x34] sm:$0xf]
    %v80 = vld [vmem:[#allocation5 + $0x38] sm:$0xf]
    %v81 = vld [vmem:[#allocation5 + $0x3c] sm:$0xf]
    %v82 = vld [vmem:[%s2] sm:$0x1]
    %v84 = vlaneseq
    %v85 = vshrl.u32 %v84, 7
    %v86 = vsub.s32 0, %v85
    %v87 = vrot.slane %v82, %v86
    %v105 = vunpack.c.l.b16 %v66
    %v106 = vunpack.c.l.b16 %v67
    %v107 = vunpack.c.l.b16 %v68
    %v108 = vunpack.c.l.b16 %v69
    %v109 = vunpack.c.l.b16 %v70
    %v110 = vunpack.c.l.b16 %v71
    %v111 = vunpack.c.l.b16 %v72
    %v112 = vunpack.c.l.b16 %v73
    %v113 = vunpack.c.l.b16 %v74
    %v114 = vunpack.c.l.b16 %v75
    %v115 = vunpack.c.l.b16 %v76
    %v116 = vunpack.c.l.b16 %v77
    %v117 = vunpack.c.l.b16 %v78
    %v118 = vunpack.c.l.b16 %v79
    %v119 = vunpack.c.l.b16 %v80
    %v120 = vunpack.c.l.b16 %v81
    %v121 = vpack.c.b16 %v106, %v105
    %v122 = vpack.c.b16 %v108, %v107
    %v123 = vpack.c.b16 %v110, %v109
    %v124 = vpack.c.b16 %v112, %v111
    %v125 = vpack.c.b16 %v114, %v113
    %v126 = vpack.c.b16 %v116, %v115
    %v127 = vpack.c.b16 %v118, %v117
    %v128 = vpack.c.b16 %v120, %v119
    %137 = vmatprep.subr.bf16.mxu0 0
    %138 = vmatpush1.bf16.msra.mxu0 %v121
    %139 = vmatprep.subr.bf16.mxu0 0
    %140 = vmatpush1.bf16.msra.mxu0 %v122
    %141 = vmatprep.subr.bf16.mxu0 0
    %142 = vmatpush1.bf16.msra.mxu0 %v123
    %143 = vmatprep.subr.bf16.mxu0 0
    %144 = vmatpush1.bf16.msra.mxu0 %v124
    %145 = vmatprep.subr.bf16.mxu0 0
    %146 = vmatpush1.bf16.msra.mxu0 %v125
    %147 = vmatprep.subr.bf16.mxu0 0
    %148 = vmatpush1.bf16.msra.mxu0 %v126
    %149 = vmatprep.subr.bf16.mxu0 0
    %150 = vmatpush1.bf16.msra.mxu0 %v127
    %151 = vmatprep.subr.bf16.mxu0 0
    %152 = vmatpush1.bf16.msra.mxu0 %v128
    %153 = vmatprep.subr.bf16.mxu0 0
    %154 = vmatpush1.bf16.msra.mxu0 0
    %155 = vmatprep.subr.bf16.mxu0 0
    %156 = vmatpush1.bf16.msra.mxu0 0
    %157 = vmatprep.subr.bf16.mxu0 0
    %158 = vmatpush1.bf16.msra.mxu0 0
    %159 = vmatprep.subr.bf16.mxu0 0
    %160 = vmatpush1.bf16.msra.mxu0 0
    %161 = vmatprep.subr.bf16.mxu0 0
    %162 = vmatpush1.bf16.msra.mxu0 0
    %163 = vmatprep.subr.bf16.mxu0 0
    %164 = vmatpush1.bf16.msra.mxu0 0
    %165 = vmatprep.subr.bf16.mxu0 0
    %166 = vmatpush1.bf16.msra.mxu0 0
    %167 = vmatprep.subr.bf16.mxu0 0
    %168 = vmatpush1.bf16.msra.mxu0 0
    %169 = vmatprep.mubr.bf16.mxu0 0
    %170 = vmatmul.mubr.bf16.gmra.mrb[0].mxu0 %v65
    %v171 = vpop.f32.mrb[0].mxu0
    %v172 = vadd.f32 %v87, %v171
    %v173 = vpop.f32.mrb[0].mxu0
    %v174 = vpop.f32.mrb[0].mxu0
    %v175 = vadd.f32 %v87, %v174
    %v176 = vpop.f32.mrb[0].mxu0
    %177 = vdwg.mxu0
    %v178 = vxor.u32 %v172, 2147483648
    %v179 = vxor.u32 %v175, 2147483648
    %v180 = vmul.f32 %v178, 1.442695
    %v181 = vpow.pop %v180
    %v182 = vmul.f32 %v179, 1.442695
    %v183 = vpow.pop %v182
    %v184 = vadd.f32 %v181, 1.0
    %v185 = vadd.f32 %v183, 1.0
    %v186 = vrcp.pop %v184
    %v187 = vmul.f32 1.0, %v186
    %v188 = vrcp.pop %v185
    %v189 = vmul.f32 1.0, %v188
    %v190 = vmul.f32 %v172, %v187
    %v191 = vmul.f32 %v175, %v189
    %v192 = vpack.c.bf16 %v191, %v190
    %v193 = vld [vmem:[#allocation7] sm:$0xf]
    %v194 = vld [vmem:[#allocation7 + $0x4] sm:$0xf]
    %v195 = vld [vmem:[#allocation7 + $0x8] sm:$0xf]
    %v196 = vld [vmem:[#allocation7 + $0xc] sm:$0xf]
    %v197 = vld [vmem:[#allocation7 + $0x10] sm:$0xf]
    %v198 = vld [vmem:[#allocation7 + $0x14] sm:$0xf]
    %v199 = vld [vmem:[#allocation7 + $0x18] sm:$0xf]
    %v200 = vld [vmem:[#allocation7 + $0x1c] sm:$0xf]
    %v201 = vld [vmem:[#allocation7 + $0x20] sm:$0xf]
    %v202 = vld [vmem:[#allocation7 + $0x24] sm:$0xf]
    %v203 = vld [vmem:[#allocation7 + $0x28] sm:$0xf]
    %v204 = vld [vmem:[#allocation7 + $0x2c] sm:$0xf]
    %v205 = vld [vmem:[#allocation7 + $0x30] sm:$0xf]
    %v206 = vld [vmem:[#allocation7 + $0x34] sm:$0xf]
    %v207 = vld [vmem:[#allocation7 + $0x38] sm:$0xf]
    %v208 = vld [vmem:[#allocation7 + $0x3c] sm:$0xf]
    %v209 = vld [vmem:[%s4] sm:$0x1]
    %v211 = vlaneseq
    %v212 = vshrl.u32 %v211, 7
    %v213 = vsub.s32 0, %v212
    %v214 = vrot.slane %v209, %v213
    %v232 = vunpack.c.l.b16 %v193
    %v233 = vunpack.c.l.b16 %v194
    %v234 = vunpack.c.l.b16 %v195
    %v235 = vunpack.c.l.b16 %v196
    %v236 = vunpack.c.l.b16 %v197
    %v237 = vunpack.c.l.b16 %v198
    %v238 = vunpack.c.l.b16 %v199
    %v239 = vunpack.c.l.b16 %v200
    %v240 = vunpack.c.l.b16 %v201
    %v241 = vunpack.c.l.b16 %v202
    %v242 = vunpack.c.l.b16 %v203
    %v243 = vunpack.c.l.b16 %v204
    %v244 = vunpack.c.l.b16 %v205
    %v245 = vunpack.c.l.b16 %v206
    %v246 = vunpack.c.l.b16 %v207
    %v247 = vunpack.c.l.b16 %v208
    %v248 = vpack.c.b16 %v233, %v232
    %v249 = vpack.c.b16 %v235, %v234
    %v250 = vpack.c.b16 %v237, %v236
    %v251 = vpack.c.b16 %v239, %v238
    %v252 = vpack.c.b16 %v241, %v240
    %v253 = vpack.c.b16 %v243, %v242
    %v254 = vpack.c.b16 %v245, %v244
    %v255 = vpack.c.b16 %v247, %v246
    %264 = vmatprep.subr.bf16.mxu0 0
    %265 = vmatpush1.bf16.msra.mxu0 %v248
    %266 = vmatprep.subr.bf16.mxu0 0
    %267 = vmatpush1.bf16.msra.mxu0 %v249
    %268 = vmatprep.subr.bf16.mxu0 0
    %269 = vmatpush1.bf16.msra.mxu0 %v250
    %270 = vmatprep.subr.bf16.mxu0 0
    %271 = vmatpush1.bf16.msra.mxu0 %v251
    %272 = vmatprep.subr.bf16.mxu0 0
    %273 = vmatpush1.bf16.msra.mxu0 %v252
    %274 = vmatprep.subr.bf16.mxu0 0
    %275 = vmatpush1.bf16.msra.mxu0 %v253
    %276 = vmatprep.subr.bf16.mxu0 0
    %277 = vmatpush1.bf16.msra.mxu0 %v254
    %278 = vmatprep.subr.bf16.mxu0 0
    %279 = vmatpush1.bf16.msra.mxu0 %v255
    %280 = vmatprep.subr.bf16.mxu0 0
    %281 = vmatpush1.bf16.msra.mxu0 0
    %282 = vmatprep.subr.bf16.mxu0 0
    %283 = vmatpush1.bf16.msra.mxu0 0
    %284 = vmatprep.subr.bf16.mxu0 0
    %285 = vmatpush1.bf16.msra.mxu0 0
    %286 = vmatprep.subr.bf16.mxu0 0
    %287 = vmatpush1.bf16.msra.mxu0 0
    %288 = vmatprep.subr.bf16.mxu0 0
    %289 = vmatpush1.bf16.msra.mxu0 0
    %290 = vmatprep.subr.bf16.mxu0 0
    %291 = vmatpush1.bf16.msra.mxu0 0
    %292 = vmatprep.subr.bf16.mxu0 0
    %293 = vmatpush1.bf16.msra.mxu0 0
    %294 = vmatprep.subr.bf16.mxu0 0
    %295 = vmatpush1.bf16.msra.mxu0 0
    %296 = vmatprep.mubr.bf16.mxu0 0
    %297 = vmatmul.mubr.bf16.gmra.mrb[0].mxu0 %v192
    %v298 = vpop.f32.mrb[0].mxu0
    %v299 = vadd.f32 %v214, %v298
    %v300 = vpop.f32.mrb[0].mxu0
    %v301 = vpop.f32.mrb[0].mxu0
    %v302 = vadd.f32 %v214, %v301
    %v303 = vpop.f32.mrb[0].mxu0
    %304 = vdwg.mxu0
    %v305 = vxor.u32 %v299, 2147483648
    %v306 = vxor.u32 %v302, 2147483648
    %v307 = vmul.f32 %v305, 1.442695
    %v308 = vpow.pop %v307
    %v309 = vmul.f32 %v306, 1.442695
    %v310 = vpow.pop %v309
    %v311 = vadd.f32 %v308, 1.0
    %v312 = vadd.f32 %v310, 1.0
    %v313 = vrcp.pop %v311
    %v314 = vmul.f32 1.0, %v313
    %v315 = vrcp.pop %v312
    %v316 = vmul.f32 1.0, %v315
    %v317 = vmul.f32 %v299, %v314
    %v318 = vmul.f32 %v302, %v316
    %v319 = vadd.f32 %v63, %v317
    %v320 = vadd.f32 %v64, %v318
    %321 = vst [vmem:[#allocation8] sm:$0xff] %v319
    %322 = vst [vmem:[#allocation8 + $0x8] sm:$0xff] %v320
    // Predicated region
    $region34: #{tpu_custom_call.1} parent=1 // pred_check
      _
    $region35: #{tpu_custom_call.1} parent=1 // pred_check_branch
      %324 = sbr.rel (0) target = $region37
    $region36: #{tpu_custom_call.1} parent=1 // pred_region
      %s326 = ssub.s32 256, 256
      %327 = vsyncadd [#allocation4], %s326
      %s328 = sshll.u32 [#allocation8], 4
      %s329 = int_to_ptr.vmem [resolvable:$true] %s328
      %334 = dma.vmem_to_hbm [thread:$0]  %s329, 256, %s5, [#allocation4], 128, 128, 8
    $region37: #{tpu_custom_call.1} parent=1 // pred_fallthru
      _
    // Predicated region
    $region38: #{tpu_custom_call.1} parent=1 // pred_check
      _
    $region39: #{tpu_custom_call.1} parent=1 // pred_check_branch
      %336 = sbr.rel (0) target = $region41
    $region40: #{tpu_custom_call.1} parent=1 // pred_region
      %337 = dma.done [#allocation4], 256
    $region41: #{tpu_custom_call.1} parent=1 // pred_fallthru
      _
    %338 = vsyncpa [#allocation3], 1
    %339 = vsyncpa [#allocation6], 1
    %340 = vsyncpa [#allocation4], 1

</llo_original>
